<compile_context>
chip_gen: v5e
topology: v5e:2x2
jax: 0.10.0
libtpu: 0.0.40
codegen_flags: <defaults>
</compile_context>

<pallas_src>
import jax
import jax.numpy as jnp
from jax import lax
from jax.experimental import pallas as pl
from jax.experimental.pallas import tpu as pltpu


def critic_kernel(x_ref, w1_ref, b1_ref, w2_ref, b2_ref, w3_ref, b3_ref, o_ref):
    # Layer 1: Linear(n_states, 128) + Tanh  (bf16 MXU matmul, f32 bias/tanh)
    h1 = jnp.tanh(
        jnp.dot(x_ref[...], w1_ref[...], preferred_element_type=jnp.float32)
        + b1_ref[...]
    ).astype(jnp.bfloat16)
    # Layer 2: Linear(128, 128) + Tanh
    h2 = jnp.tanh(
        jnp.dot(h1, w2_ref[...], preferred_element_type=jnp.float32)
        + b2_ref[...]
    ).astype(jnp.bfloat16)
    # Layer 3: Linear(128, 1), computed transposed so the output is lane-dense:
    #   (1, 128) . (tile_b, 128)^T -> (1, tile_b)
    v = lax.dot_general(
        w3_ref[...], h2,
        dimension_numbers=(((1,), (1,)), ((), ())),
        preferred_element_type=jnp.float32,
    )
    o_ref[...] = v + b3_ref[0, 0]


def _round_up(x, m):
    return (x + m - 1) // m * m


def critic_forward(x, w1, b1, w2, b2, w3, b3, *, tile_b=512):
    B, n_states = x.shape
    H = w1.shape[1]

    # Output block is (1, tile_b) -> tile_b must be a multiple of 128 (lane-dense).
    tile_b = min(tile_b, _round_up(B, 128))
    Bp = _round_up(B, tile_b)
    if Bp != B:
        x = jnp.pad(x, ((0, Bp - B), (0, 0)))
    grid_b = Bp // tile_b

    # bf16 matmul operands (halves the weight DMA), f32 biases / accumulation.
    xb = x.astype(jnp.bfloat16)
    w1b = w1.astype(jnp.bfloat16)
    w2b = w2.astype(jnp.bfloat16)
    w3r = w3.reshape(1, H).astype(jnp.bfloat16)
    b1r = b1.reshape(1, H).astype(jnp.float32)
    b2r = b2.reshape(1, H).astype(jnp.float32)
    b3r = b3.reshape(1, 1).astype(jnp.float32)

    out = pl.pallas_call(
        critic_kernel,
        out_shape=jax.ShapeDtypeStruct((1, Bp), jnp.float32),
        grid=(grid_b,),
        in_specs=[
            pl.BlockSpec((tile_b, n_states), lambda i: (i, 0)),   # x tile (pipelined)
            pl.BlockSpec((n_states, H), lambda i: (0, 0)),        # w1 (VMEM-resident)
            pl.BlockSpec((1, H), lambda i: (0, 0)),               # b1
            pl.BlockSpec((H, H), lambda i: (0, 0)),               # w2
            pl.BlockSpec((1, H), lambda i: (0, 0)),               # b2
            pl.BlockSpec((1, H), lambda i: (0, 0)),               # w3 (as a row)
            pl.BlockSpec(memory_space=pltpu.MemorySpace.SMEM),    # b3 scalar in SMEM
        ],
        out_specs=pl.BlockSpec((1, tile_b), lambda i: (0, i)),    # lane-dense output
        compiler_params=pltpu.CompilerParams(
            dimension_semantics=("parallel",),
        ),
    )(xb, w1b, b1r, w2b, b2r, w3r, b3r)

    # (1, B) and (B, 1) share the same row-major layout -> free reshape.
    return out[:, :B].reshape(B, 1)


def init_linear_params(key, fan_in, fan_out):
    # Mimic PyTorch nn.Linear default init: U(-1/sqrt(fan_in), 1/sqrt(fan_in)).
    kw, kb = jax.random.split(key)
    bound = 1.0 / jnp.sqrt(jnp.float32(fan_in))
    w = jax.random.uniform(kw, (fan_in, fan_out), jnp.float32, -bound, bound)
    b = jax.random.uniform(kb, (1, fan_out), jnp.float32, -bound, bound)
    return w, b


if __name__ == "__main__":
    n_states = 4      # CartPole observation size
    hidden = 128
    batch = 1024      # rollout-sized batch (amortizes launch/DMA overhead)

    key = jax.random.PRNGKey(0)
    k_x, k1, k2, k3 = jax.random.split(key, 4)

    x = jax.random.normal(k_x, (batch, n_states), jnp.float32)
    w1, b1 = init_linear_params(k1, n_states, hidden)
    w2, b2 = init_linear_params(k2, hidden, hidden)
    w3, b3 = init_linear_params(k3, hidden, 1)

    out = critic_forward(x, w1, b1, w2, b2, w3, b3)
    out = jax.block_until_ready(out)
    assert out.shape == (batch, 1)

    # Reference 1: same bf16-input / f32-accumulate arithmetic as the kernel.
    xb, w1b, w2b, w3b = (a.astype(jnp.bfloat16) for a in (x, w1, w2, w3))
    h1 = jnp.tanh(jnp.dot(xb, w1b, preferred_element_type=jnp.float32) + b1)
    h2 = jnp.tanh(jnp.dot(h1.astype(jnp.bfloat16), w2b,
                          preferred_element_type=jnp.float32) + b2)
    ref_bf16 = jnp.dot(h2.astype(jnp.bfloat16), w3b,
                       preferred_element_type=jnp.float32) + b3
    assert jnp.allclose(out, ref_bf16, atol=2e-3, rtol=2e-3)

    # Reference 2: full-f32 PyTorch-equivalent forward (loose tolerance for bf16 inputs).
    h1f = jnp.tanh(x @ w1 + b1)
    h2f = jnp.tanh(h1f @ w2 + b2)
    ref_f32 = h2f @ w3 + b3
    assert jnp.allclose(out, ref_f32, atol=5e-2, rtol=5e-2)

    print("KERNEL_OK")
</pallas_src>

<mosaic_0001>
module attributes {stable_mosaic.version = 11 : i64} {
  func.func @critic_kernel(%arg0: i32, %arg1: memref<512x4xbf16, #tpu.memory_space<vmem>>, %arg2: memref<4x128xbf16, #tpu.memory_space<vmem>>, %arg3: memref<1x128xf32, #tpu.memory_space<vmem>>, %arg4: memref<128x128xbf16, #tpu.memory_space<vmem>>, %arg5: memref<1x128xf32, #tpu.memory_space<vmem>>, %arg6: memref<1x128xbf16, #tpu.memory_space<vmem>>, %arg7: memref<1x1xf32, #tpu.memory_space<smem>>, %arg8: memref<1x512xf32, #tpu.memory_space<vmem>>) attributes {dimension_semantics = [#tpu.dimension_semantics<parallel>], iteration_bounds = array<i64: 2>, scalar_prefetch = 0 : i64, scratch_operands = 0 : i64, tpu.core_type = #tpu.core_type<tc>, window_params = [{transform_indices = @transform_0, window_bounds = array<i64: 512, 4>}, {pipeline_mode = #tpu.pipeline_mode<synchronous>, transform_indices = @transform_1, window_bounds = array<i64: 4, 128>}, {pipeline_mode = #tpu.pipeline_mode<synchronous>, transform_indices = @transform_2, window_bounds = array<i64: 1, 128>}, {pipeline_mode = #tpu.pipeline_mode<synchronous>, transform_indices = @transform_3, window_bounds = array<i64: 128, 128>}, {pipeline_mode = #tpu.pipeline_mode<synchronous>, transform_indices = @transform_4, window_bounds = array<i64: 1, 128>}, {pipeline_mode = #tpu.pipeline_mode<synchronous>, transform_indices = @transform_5, window_bounds = array<i64: 1, 128>}, {transform_indices = @transform_6, window_bounds = array<i64: 1, 1>}, {transform_indices = @transform_7, window_bounds = array<i64: 1, 512>}]} {
    %c0 = arith.constant 0 : index
    %c0_0 = arith.constant 0 : index
    %0 = vector.load %arg1[%c0, %c0_0] : memref<512x4xbf16, #tpu.memory_space<vmem>>, vector<512x4xbf16>
    %c0_1 = arith.constant 0 : index
    %c0_2 = arith.constant 0 : index
    %1 = vector.load %arg2[%c0_1, %c0_2] : memref<4x128xbf16, #tpu.memory_space<vmem>>, vector<4x128xbf16>
    %cst = arith.constant dense<0.000000e+00> : vector<512x128xf32>
    %2 = tpu.matmul %0, %1, %cst {dimension_numbers = #tpu.dot_dimension_numbers<[1], [0], [0], [1], [0, 0, 1, 1], [], []>} : vector<512x4xbf16>, vector<4x128xbf16>, vector<512x128xf32> -> vector<512x128xf32>
    %c0_3 = arith.constant 0 : index
    %c0_4 = arith.constant 0 : index
    %3 = vector.load %arg3[%c0_3, %c0_4] : memref<1x128xf32, #tpu.memory_space<vmem>>, vector<1x128xf32>
    %4 = vector.broadcast %3 : vector<1x128xf32> to vector<512x128xf32>
    %5 = arith.addf %2, %4 : vector<512x128xf32>
    %6 = math.tanh %5 : vector<512x128xf32>
    %7 = arith.truncf %6 : vector<512x128xf32> to vector<512x128xbf16>
    %c0_5 = arith.constant 0 : index
    %c0_6 = arith.constant 0 : index
    %8 = vector.load %arg4[%c0_5, %c0_6] : memref<128x128xbf16, #tpu.memory_space<vmem>>, vector<128x128xbf16>
    %cst_7 = arith.constant dense<0.000000e+00> : vector<512x128xf32>
    %9 = tpu.matmul %7, %8, %cst_7 {dimension_numbers = #tpu.dot_dimension_numbers<[1], [0], [0], [1], [0, 0, 1, 1], [], []>} : vector<512x128xbf16>, vector<128x128xbf16>, vector<512x128xf32> -> vector<512x128xf32>
    %c0_8 = arith.constant 0 : index
    %c0_9 = arith.constant 0 : index
    %10 = vector.load %arg5[%c0_8, %c0_9] : memref<1x128xf32, #tpu.memory_space<vmem>>, vector<1x128xf32>
    %11 = vector.broadcast %10 : vector<1x128xf32> to vector<512x128xf32>
    %12 = arith.addf %9, %11 : vector<512x128xf32>
    %13 = math.tanh %12 : vector<512x128xf32>
    %14 = arith.truncf %13 : vector<512x128xf32> to vector<512x128xbf16>
    %c0_10 = arith.constant 0 : index
    %c0_11 = arith.constant 0 : index
    %15 = vector.load %arg6[%c0_10, %c0_11] : memref<1x128xbf16, #tpu.memory_space<vmem>>, vector<1x128xbf16>
    %cst_12 = arith.constant dense<0.000000e+00> : vector<1x512xf32>
    %16 = tpu.matmul %15, %14, %cst_12 {dimension_numbers = #tpu.dot_dimension_numbers<[1], [1], [0], [0], [0, 0, 1, 0], [], []>} : vector<1x128xbf16>, vector<512x128xbf16>, vector<1x512xf32> -> vector<1x512xf32>
    %c0_13 = arith.constant 0 : index
    %c0_14 = arith.constant 0 : index
    %17 = memref.load %arg7[%c0_13, %c0_14] : memref<1x1xf32, #tpu.memory_space<smem>>
    %18 = vector.broadcast %17 : f32 to vector<1x512xf32>
    %19 = arith.addf %16, %18 : vector<1x512xf32>
    %c0_15 = arith.constant 0 : index
    %c0_16 = arith.constant 0 : index
    %20 = vector.load %arg8[%c0_15, %c0_16] : memref<1x512xf32, #tpu.memory_space<vmem>>, vector<1x512xf32>
    tpu.vector_store %arg8[%c0_15, %c0_16], %19 {strides = array<i32>} : memref<1x512xf32, #tpu.memory_space<vmem>>, vector<1x512xf32>,
    return
  }
  func.func @transform_0(%arg0: i32) -> (i32, i32) {
    %c0_i32 = arith.constant 0 : i32
    %c0_i32_0 = arith.constant 0 : i32
    return %arg0, %c0_i32 : i32, i32
  }
  func.func @transform_1(%arg0: i32) -> (i32, i32) {
    %c0_i32 = arith.constant 0 : i32
    %c0_i32_0 = arith.constant 0 : i32
    %c0_i32_1 = arith.constant 0 : i32
    return %c0_i32, %c0_i32_0 : i32, i32
  }
  func.func @transform_2(%arg0: i32) -> (i32, i32) {
    %c0_i32 = arith.constant 0 : i32
    %c0_i32_0 = arith.constant 0 : i32
    %c0_i32_1 = arith.constant 0 : i32
    return %c0_i32, %c0_i32_0 : i32, i32
  }
  func.func @transform_3(%arg0: i32) -> (i32, i32) {
    %c0_i32 = arith.constant 0 : i32
    %c0_i32_0 = arith.constant 0 : i32
    %c0_i32_1 = arith.constant 0 : i32
    return %c0_i32, %c0_i32_0 : i32, i32
  }
  func.func @transform_4(%arg0: i32) -> (i32, i32) {
    %c0_i32 = arith.constant 0 : i32
    %c0_i32_0 = arith.constant 0 : i32
    %c0_i32_1 = arith.constant 0 : i32
    return %c0_i32, %c0_i32_0 : i32, i32
  }
  func.func @transform_5(%arg0: i32) -> (i32, i32) {
    %c0_i32 = arith.constant 0 : i32
    %c0_i32_0 = arith.constant 0 : i32
    %c0_i32_1 = arith.constant 0 : i32
    return %c0_i32, %c0_i32_0 : i32, i32
  }
  func.func @transform_6(%arg0: i32) -> (i32, i32) {
    %c0_i32 = arith.constant 0 : i32
    %c0_i32_0 = arith.constant 0 : i32
    %c0_i32_1 = arith.constant 0 : i32
    return %c0_i32, %c0_i32_0 : i32, i32
  }
  func.func @transform_7(%arg0: i32) -> (i32, i32) {
    %c0_i32 = arith.constant 0 : i32
    %c0_i32_0 = arith.constant 0 : i32
    return %c0_i32, %arg0 : i32, i32
  }
}

</mosaic_0001>

<llo_original>
// kernel: tpu_custom_call.1
$region0: #{tpu_custom_call.1}
  #allocation0 [shape = 'u32[]', space=smem, size = 0x4, offset = 0x4, fixed_abs, tag = 'smem constant byte address 0x4 - core index']
  #allocation1 [shape = 'u32[72,128]{1,0:T(1,128)}', space=vmem, size = 0x9000, scoped, tag = 'internal scratch']
  #allocation2 [shape = 'f32[1,1]{1,0:T(1,128)S(6)}', space=smem, size = 0x200, scoped, tag = 'scoped memory for tpu_custom_call.1']
  %s0 = inlined_call_operand.vmem [shape: bf16[1024,4], index: 0, kind: input, shape index: {}]
  %s1 = inlined_call_operand.vmem [shape: bf16[4,128], index: 1, kind: input, shape index: {}]
  %s2 = inlined_call_operand.vmem [shape: f32[1,128], index: 2, kind: input, shape index: {}]
  %s3 = inlined_call_operand.vmem [shape: bf16[128,128], index: 3, kind: input, shape index: {}]
  %s4 = inlined_call_operand.vmem [shape: f32[1,128], index: 4, kind: input, shape index: {}]
  %s5 = inlined_call_operand.vmem [shape: bf16[1,128], index: 5, kind: input, shape index: {}]
  %s6 = inlined_call_operand.<no memory space> [shape: f32[1,1], index: 6, kind: input, shape index: {}]
  %s7 = inlined_call_operand.hbm [shape: f32[1,1024], index: 7, kind: output, shape index: {}]
  %s8 = sld [smem:[#allocation0]]
  $region61: #{tpu_custom_call.1} parent=0
    _
  %s10 = ssub.s32 1, %s8
  %s11 = scalar_select 0, %s10, %s8
  %12 = sst [smem:[#allocation2]] %s6
  $region1: #{tpu_custom_call.1} parent=0
    #allocation3 [shape = 'u8[4096]{0}', space=vmem, size = 0x1000, scoped, tag = 'output window, operand 0']
    #allocation4 [shape = 's32[2]{0}', space=sflag, size = 0x8, scoped, tag = 'scoped memory for tpu_custom_call.1']
    %13 = vsyncpa [#allocation4], 0
    %s14 = scalar_lea.sflag [#allocation4], 1
    %15 = vsyncpa %s14, 0
    loop: start=0, step=1, limit=4
    $region2: #{tpu_custom_call.1} parent=1 // loop_pre_header
      _
    $region3: #{tpu_custom_call.1} parent=1 // loop_header
      %s17 = sphi 0, %s21
      %p18 = scmp.ge.s32.totalorder %s17, 4
      %s27 = sphi 0, %s29
      %s30 = sphi 0, %s27
      %s31 = sphi 0, %s30
      %s47 = sphi 0, %s31
      %s51 = sphi 0, %s51
      %s53 = sphi 0, %s51
      %s54 = sphi 0, %s53
      %s68 = sphi 0, %s54
      %s72 = sphi 0, %s72
      %s74 = sphi 0, %s72
      %s75 = sphi 0, %s74
      %s89 = sphi 0, %s75
      %s93 = sphi 0, %s93
      %s95 = sphi 0, %s93
      %s96 = sphi 0, %s95
      %s110 = sphi 0, %s96
      %s114 = sphi 0, %s114
      %s116 = sphi 0, %s114
      %s117 = sphi 0, %s116
      %s131 = sphi 0, %s117
      %s135 = sphi 0, %s135
      %s137 = sphi 0, %s135
      %s138 = sphi 0, %s137
      %s152 = sphi 0, %s138
      %s156 = sphi 0, %s156
      %s158 = sphi 0, %s156
      %s159 = sphi 0, %s158
      %s173 = sphi 0, %s159
      %s179 = sphi 0, %s181
      %s182 = sphi 0, %s179
      %s183 = sphi 0, %s182
      %s199 = sphi 0, %s183
    $region4: #{tpu_custom_call.1} parent=1 // loop_header_branch
      %20 = sbr.rel (%p18) target = $region8
    $region5: #{tpu_custom_call.1} parent=1 // loop_body
      %s22 = ssub.s32 %s17, 1
      %s23 = ssub.s32 %s17, 2
      %s24 = sadd.s32 %s17, 1
      %s25 = ssub.s32 %s17, %s24
      %p26 = scmp.eq.s32.totalorder %s25, 0
      %s28 = sadd.s32 %s27, 1
      %s29 = scalar_select %p26, %s27, %s28
      %p32 = pneg %p26
      %p33 = scmp.eq.s32.totalorder %s17, 1
      %p34 = por %p32, %p33
      %p35 = scmp.ne.s32.totalorder %s27, %s30
      %p36 = scmp.eq.s32.totalorder %s17, 0
      %p37 = por %p35, %p36
      %p38 = scmp.ne.s32.totalorder %s27, %s30
      %p39 = scmp.eq.s32.totalorder %s22, 1
      %p40 = por %p38, %p39
      %p41 = scmp.ne.s32.totalorder %s30, %s31
      %p42 = scmp.eq.s32.totalorder %s22, 0
      %p43 = por %p41, %p42
      %p44 = scmp.ne.s32.totalorder %s30, %s31
      %p45 = scmp.eq.s32.totalorder %s23, 1
      %p46 = por %p44, %p45
      %p48 = scmp.ne.s32.totalorder %s31, %s47
      %p49 = scmp.eq.s32.totalorder %s23, 0
      %p50 = por %p48, %p49
      %s52 = sadd.s32 %s51, 1
      %p55 = scmp.eq.s32.totalorder %s17, 1
      %p56 = scmp.ne.s32.totalorder %s51, %s53
      %p57 = scmp.eq.s32.totalorder %s17, 0
      %p58 = por %p56, %p57
      %p59 = scmp.ne.s32.totalorder %s51, %s53
      %p60 = scmp.eq.s32.totalorder %s22, 1
      %p61 = por %p59, %p60
      %p62 = scmp.ne.s32.totalorder %s53, %s54
      %p63 = scmp.eq.s32.totalorder %s22, 0
      %p64 = por %p62, %p63
      %p65 = scmp.ne.s32.totalorder %s53, %s54
      %p66 = scmp.eq.s32.totalorder %s23, 1
      %p67 = por %p65, %p66
      %p69 = scmp.ne.s32.totalorder %s54, %s68
      %p70 = scmp.eq.s32.totalorder %s23, 0
      %p71 = por %p69, %p70
      %s73 = sadd.s32 %s72, 1
      %p76 = scmp.eq.s32.totalorder %s17, 1
      %p77 = scmp.ne.s32.totalorder %s72, %s74
      %p78 = scmp.eq.s32.totalorder %s17, 0
      %p79 = por %p77, %p78
      %p80 = scmp.ne.s32.totalorder %s72, %s74
      %p81 = scmp.eq.s32.totalorder %s22, 1
      %p82 = por %p80, %p81
      %p83 = scmp.ne.s32.totalorder %s74, %s75
      %p84 = scmp.eq.s32.totalorder %s22, 0
      %p85 = por %p83, %p84
      %p86 = scmp.ne.s32.totalorder %s74, %s75
      %p87 = scmp.eq.s32.totalorder %s23, 1
      %p88 = por %p86, %p87
      %p90 = scmp.ne.s32.totalorder %s75, %s89
      %p91 = scmp.eq.s32.totalorder %s23, 0
      %p92 = por %p90, %p91
      %s94 = sadd.s32 %s93, 1
      %p97 = scmp.eq.s32.totalorder %s17, 1
      %p98 = scmp.ne.s32.totalorder %s93, %s95
      %p99 = scmp.eq.s32.totalorder %s17, 0
      %p100 = por %p98, %p99
      %p101 = scmp.ne.s32.totalorder %s93, %s95
      %p102 = scmp.eq.s32.totalorder %s22, 1
      %p103 = por %p101, %p102
      %p104 = scmp.ne.s32.totalorder %s95, %s96
      %p105 = scmp.eq.s32.totalorder %s22, 0
      %p106 = por %p104, %p105
      %p107 = scmp.ne.s32.totalorder %s95, %s96
      %p108 = scmp.eq.s32.totalorder %s23, 1
      %p109 = por %p107, %p108
      %p111 = scmp.ne.s32.totalorder %s96, %s110
      %p112 = scmp.eq.s32.totalorder %s23, 0
      %p113 = por %p111, %p112
      %s115 = sadd.s32 %s114, 1
      %p118 = scmp.eq.s32.totalorder %s17, 1
      %p119 = scmp.ne.s32.totalorder %s114, %s116
      %p120 = scmp.eq.s32.totalorder %s17, 0
      %p121 = por %p119, %p120
      %p122 = scmp.ne.s32.totalorder %s114, %s116
      %p123 = scmp.eq.s32.totalorder %s22, 1
      %p124 = por %p122, %p123
      %p125 = scmp.ne.s32.totalorder %s116, %s117
      %p126 = scmp.eq.s32.totalorder %s22, 0
      %p127 = por %p125, %p126
      %p128 = scmp.ne.s32.totalorder %s116, %s117
      %p129 = scmp.eq.s32.totalorder %s23, 1
      %p130 = por %p128, %p129
      %p132 = scmp.ne.s32.totalorder %s117, %s131
      %p133 = scmp.eq.s32.totalorder %s23, 0
      %p134 = por %p132, %p133
      %s136 = sadd.s32 %s135, 1
      %p139 = scmp.eq.s32.totalorder %s17, 1
      %p140 = scmp.ne.s32.totalorder %s135, %s137
      %p141 = scmp.eq.s32.totalorder %s17, 0
      %p142 = por %p140, %p141
      %p143 = scmp.ne.s32.totalorder %s135, %s137
      %p144 = scmp.eq.s32.totalorder %s22, 1
      %p145 = por %p143, %p144
      %p146 = scmp.ne.s32.totalorder %s137, %s138
      %p147 = scmp.eq.s32.totalorder %s22, 0
      %p148 = por %p146, %p147
      %p149 = scmp.ne.s32.totalorder %s137, %s138
      %p150 = scmp.eq.s32.totalorder %s23, 1
      %p151 = por %p149, %p150
      %p153 = scmp.ne.s32.totalorder %s138, %s152
      %p154 = scmp.eq.s32.totalorder %s23, 0
      %p155 = por %p153, %p154
      %s157 = sadd.s32 %s156, 1
      %p160 = scmp.eq.s32.totalorder %s17, 1
      %p161 = scmp.ne.s32.totalorder %s156, %s158
      %p162 = scmp.eq.s32.totalorder %s17, 0
      %p163 = por %p161, %p162
      %p164 = scmp.ne.s32.totalorder %s156, %s158
      %p165 = scmp.eq.s32.totalorder %s22, 1
      %p166 = por %p164, %p165
      %p167 = scmp.ne.s32.totalorder %s158, %s159
      %p168 = scmp.eq.s32.totalorder %s22, 0
      %p169 = por %p167, %p168
      %p170 = scmp.ne.s32.totalorder %s158, %s159
      %p171 = scmp.eq.s32.totalorder %s23, 1
      %p172 = por %p170, %p171
      %p174 = scmp.ne.s32.totalorder %s159, %s173
      %p175 = scmp.eq.s32.totalorder %s23, 0
      %p176 = por %p174, %p175
      %s177 = ssub.s32 %s17, %s24
      %p178 = scmp.eq.s32.totalorder %s177, 0
      %s180 = sadd.s32 %s179, 1
      %s181 = scalar_select %p178, %s179, %s180
      %p184 = pneg %p178
      %p185 = scmp.eq.s32.totalorder %s17, 1
      %p186 = por %p184, %p185
      %p187 = scmp.ne.s32.totalorder %s179, %s182
      %p188 = scmp.eq.s32.totalorder %s17, 0
      %p189 = por %p187, %p188
      %p190 = scmp.ne.s32.totalorder %s179, %s182
      %p191 = scmp.eq.s32.totalorder %s22, 1
      %p192 = por %p190, %p191
      %p193 = scmp.ne.s32.totalorder %s182, %s183
      %p194 = scmp.eq.s32.totalorder %s22, 0
      %p195 = por %p193, %p194
      %p196 = scmp.ne.s32.totalorder %s182, %s183
      %p197 = scmp.eq.s32.totalorder %s23, 1
      %p198 = por %p196, %p197
      %p200 = scmp.ne.s32.totalorder %s183, %s199
      %p201 = scmp.eq.s32.totalorder %s23, 0
      %p202 = por %p200, %p201
      %p203 = scmp.le.s32.totalorder 1, %s17
      %p204 = scmp.lt.s32.totalorder %s17, 3
      %p205 = pnand %p203, %p204
      %p206 = pneg %p205
      // Predicated region
      $region9: #{tpu_custom_call.1} parent=5 // pred_check
        _
      $region10: #{tpu_custom_call.1} parent=5 // pred_check_branch
        %208 = sbr.rel (%p205) target = $region12
      $region11: #{tpu_custom_call.1} parent=5 // pred_region
        %s209 = ssub.s32 %s17, 1
        // Predicated region
        $region13: #{tpu_custom_call.1} parent=11 // pred_check
          %p210 = pneg %p64
        $region14: #{tpu_custom_call.1} parent=11 // pred_check_branch
          %212 = sbr.rel (%p210) target = $region16
        $region15: #{tpu_custom_call.1} parent=11 // pred_region
          _
        $region16: #{tpu_custom_call.1} parent=11 // pred_fallthru
          _
        // Predicated region
        $region17: #{tpu_custom_call.1} parent=11 // pred_check
          %p213 = pneg %p85
        $region18: #{tpu_custom_call.1} parent=11 // pred_check_branch
          %215 = sbr.rel (%p213) target = $region20
        $region19: #{tpu_custom_call.1} parent=11 // pred_region
          _
        $region20: #{tpu_custom_call.1} parent=11 // pred_fallthru
          _
        // Predicated region
        $region21: #{tpu_custom_call.1} parent=11 // pred_check
          %p216 = pneg %p106
        $region22: #{tpu_custom_call.1} parent=11 // pred_check_branch
          %218 = sbr.rel (%p216) target = $region24
        $region23: #{tpu_custom_call.1} parent=11 // pred_region
          _
        $region24: #{tpu_custom_call.1} parent=11 // pred_fallthru
          _
        // Predicated region
        $region25: #{tpu_custom_call.1} parent=11 // pred_check
          %p219 = pneg %p127
        $region26: #{tpu_custom_call.1} parent=11 // pred_check_branch
          %221 = sbr.rel (%p219) target = $region28
        $region27: #{tpu_custom_call.1} parent=11 // pred_region
          _
        $region28: #{tpu_custom_call.1} parent=11 // pred_fallthru
          _
        // Predicated region
        $region29: #{tpu_custom_call.1} parent=11 // pred_check
          %p222 = pneg %p148
        $region30: #{tpu_custom_call.1} parent=11 // pred_check_branch
          %224 = sbr.rel (%p222) target = $region32
        $region31: #{tpu_custom_call.1} parent=11 // pred_region
          _
        $region32: #{tpu_custom_call.1} parent=11 // pred_fallthru
          _
        // Predicated region
        $region33: #{tpu_custom_call.1} parent=11 // pred_check
          %p225 = pneg %p169
        $region34: #{tpu_custom_call.1} parent=11 // pred_check_branch
          %227 = sbr.rel (%p225) target = $region36
        $region35: #{tpu_custom_call.1} parent=11 // pred_region
          _
        $region36: #{tpu_custom_call.1} parent=11 // pred_fallthru
          _
      $region12: #{tpu_custom_call.1} parent=5 // pred_fallthru
        _
      %p228 = scmp.lt.s32.totalorder %s17, 2
      // Predicated region
      $region37: #{tpu_custom_call.1} parent=5 // pred_check
        %p229 = pneg %p228
      $region38: #{tpu_custom_call.1} parent=5 // pred_check_branch
        %231 = sbr.rel (%p229) target = $region40
      $region39: #{tpu_custom_call.1} parent=5 // pred_region
        // Predicated region
        $region41: #{tpu_custom_call.1} parent=39 // pred_check
          %p232 = pneg %p37
        $region42: #{tpu_custom_call.1} parent=39 // pred_check_branch
          %234 = sbr.rel (%p232) target = $region44
        $region43: #{tpu_custom_call.1} parent=39 // pred_region
          %s235 = smul.u32 64, %s17
          %p236 = scmp.lt.s32.totalorder %s235, 127
          %s237 = scalar_select %p236, %s235, 127
          %s238 = smul.addr %s237, 4
          %s239 = scalar_lea.vmem %s0, %s238
          %s240 = smul.u32 64, %s17
        $region44: #{tpu_custom_call.1} parent=39 // pred_fallthru
          _
      $region40: #{tpu_custom_call.1} parent=5 // pred_fallthru
        _
      %p241 = scmp.le.s32.totalorder 1, %s17
      %p242 = scmp.lt.s32.totalorder %s17, 3
      %p243 = pnand %p241, %p242
      %p244 = pneg %p243
      // Predicated region
      $region45: #{tpu_custom_call.1} parent=5 // pred_check
        _
      $region46: #{tpu_custom_call.1} parent=5 // pred_check_branch
        %246 = sbr.rel (%p243) target = $region48
      $region47: #{tpu_custom_call.1} parent=5 // pred_region
        %s247 = ssub.s32 %s17, 1
        %s248 = smul.u32 64, %s22
        %p249 = scmp.lt.s32.totalorder %s248, 127
        %s250 = scalar_select %p249, %s248, 127
        %s251 = smul.addr %s250, 4
        %s252 = scalar_lea.vmem %s0, %s251
        %p253 = pneg %p43
        %p254 = pneg %p40
        %p255 = pneg %p64
        %p256 = pneg %p61
        %p257 = pneg %p85
        %p258 = pneg %p82
        %p259 = pneg %p106
        %p260 = pneg %p103
        %p261 = pneg %p127
        %p262 = pneg %p124
        %p263 = pneg %p148
        %p264 = pneg %p145
        %p265 = pneg %p169
        %p266 = pneg %p166
        %p267 = pneg %p195
        %p268 = pneg %p192
        %s269 = sand.u32 %s182, 1
        %s270 = scalar_lea.sflag [#allocation4], %s269
        %s271 = sand.u32 %s182, 1
        %s272 = smul.addr %s271, 4
        %s273 = scalar_lea.vmem [#allocation3], %s272
        %s274 = smul.u32 64, %s22
        %p275 = scmp.lt.s32.totalorder %s274, 127
        %s276 = scalar_select %p275, %s274, 127
        %s277 = smul.addr %s276, 4
        %s278 = scalar_lea.vmem %s0, %s277
        %s279 = smul.u32 64, %s22
        %s280 = smul.u32 4, %s22
        %v282 = vld [vmem:[%s278] sm:$0xf]
        %v283 = vld [vmem:[%s278 + $0x4] sm:$0xf]
        %v284 = vld [vmem:[%s278 + $0x8] sm:$0xf]
        %v285 = vld [vmem:[%s278 + $0xc] sm:$0xf]
        %v286 = vld [vmem:[%s278 + $0x10] sm:$0xf]
        %v287 = vld [vmem:[%s278 + $0x14] sm:$0xf]
        %v288 = vld [vmem:[%s278 + $0x18] sm:$0xf]
        %v289 = vld [vmem:[%s278 + $0x1c] sm:$0xf]
        %v290 = vld [vmem:[%s278 + $0x20] sm:$0xf]
        %v291 = vld [vmem:[%s278 + $0x24] sm:$0xf]
        %v292 = vld [vmem:[%s278 + $0x28] sm:$0xf]
        %v293 = vld [vmem:[%s278 + $0x2c] sm:$0xf]
        %v294 = vld [vmem:[%s278 + $0x30] sm:$0xf]
        %v295 = vld [vmem:[%s278 + $0x34] sm:$0xf]
        %v296 = vld [vmem:[%s278 + $0x38] sm:$0xf]
        %v297 = vld [vmem:[%s278 + $0x3c] sm:$0xf]
        %v298 = vld [vmem:[%s278 + $0x40] sm:$0xf]
        %v299 = vld [vmem:[%s278 + $0x44] sm:$0xf]
        %v300 = vld [vmem:[%s278 + $0x48] sm:$0xf]
        %v301 = vld [vmem:[%s278 + $0x4c] sm:$0xf]
        %v302 = vld [vmem:[%s278 + $0x50] sm:$0xf]
        %v303 = vld [vmem:[%s278 + $0x54] sm:$0xf]
        %v304 = vld [vmem:[%s278 + $0x58] sm:$0xf]
        %v305 = vld [vmem:[%s278 + $0x5c] sm:$0xf]
        %v306 = vld [vmem:[%s278 + $0x60] sm:$0xf]
        %v307 = vld [vmem:[%s278 + $0x64] sm:$0xf]
        %v308 = vld [vmem:[%s278 + $0x68] sm:$0xf]
        %v309 = vld [vmem:[%s278 + $0x6c] sm:$0xf]
        %v310 = vld [vmem:[%s278 + $0x70] sm:$0xf]
        %v311 = vld [vmem:[%s278 + $0x74] sm:$0xf]
        %v312 = vld [vmem:[%s278 + $0x78] sm:$0xf]
        %v313 = vld [vmem:[%s278 + $0x7c] sm:$0xf]
        %v314 = vld [vmem:[%s278 + $0x80] sm:$0xf]
        %v315 = vld [vmem:[%s278 + $0x84] sm:$0xf]
        %v316 = vld [vmem:[%s278 + $0x88] sm:$0xf]
        %v317 = vld [vmem:[%s278 + $0x8c] sm:$0xf]
        %v318 = vld [vmem:[%s278 + $0x90] sm:$0xf]
        %v319 = vld [vmem:[%s278 + $0x94] sm:$0xf]
        %v320 = vld [vmem:[%s278 + $0x98] sm:$0xf]
        %v321 = vld [vmem:[%s278 + $0x9c] sm:$0xf]
        %v322 = vld [vmem:[%s278 + $0xa0] sm:$0xf]
        %v323 = vld [vmem:[%s278 + $0xa4] sm:$0xf]
        %v324 = vld [vmem:[%s278 + $0xa8] sm:$0xf]
        %v325 = vld [vmem:[%s278 + $0xac] sm:$0xf]
        %v326 = vld [vmem:[%s278 + $0xb0] sm:$0xf]
        %v327 = vld [vmem:[%s278 + $0xb4] sm:$0xf]
        %v328 = vld [vmem:[%s278 + $0xb8] sm:$0xf]
        %v329 = vld [vmem:[%s278 + $0xbc] sm:$0xf]
        %v330 = vld [vmem:[%s278 + $0xc0] sm:$0xf]
        %v331 = vld [vmem:[%s278 + $0xc4] sm:$0xf]
        %v332 = vld [vmem:[%s278 + $0xc8] sm:$0xf]
        %v333 = vld [vmem:[%s278 + $0xcc] sm:$0xf]
        %v334 = vld [vmem:[%s278 + $0xd0] sm:$0xf]
        %v335 = vld [vmem:[%s278 + $0xd4] sm:$0xf]
        %v336 = vld [vmem:[%s278 + $0xd8] sm:$0xf]
        %v337 = vld [vmem:[%s278 + $0xdc] sm:$0xf]
        %v338 = vld [vmem:[%s278 + $0xe0] sm:$0xf]
        %v339 = vld [vmem:[%s278 + $0xe4] sm:$0xf]
        %v340 = vld [vmem:[%s278 + $0xe8] sm:$0xf]
        %v341 = vld [vmem:[%s278 + $0xec] sm:$0xf]
        %v342 = vld [vmem:[%s278 + $0xf0] sm:$0xf]
        %v343 = vld [vmem:[%s278 + $0xf4] sm:$0xf]
        %v344 = vld [vmem:[%s278 + $0xf8] sm:$0xf]
        %v345 = vld [vmem:[%s278 + $0xfc] sm:$0xf]
        %v346 = vld [vmem:[%s1] sm:$0x3]
        %v347 = vld [vmem:[%s2] sm:$0x1]
        %v349 = vperm.slane %v347, 0
        %v415 = vunpack.c.l.b16 %v282
        %v416 = vunpack.c.l.b16 %v283
        %v417 = vunpack.c.l.b16 %v284
        %v418 = vunpack.c.l.b16 %v285
        %v419 = vunpack.c.l.b16 %v286
        %v420 = vunpack.c.l.b16 %v287
        %v421 = vunpack.c.l.b16 %v288
        %v422 = vunpack.c.l.b16 %v289
        %v423 = vunpack.c.l.b16 %v290
        %v424 = vunpack.c.l.b16 %v291
        %v425 = vunpack.c.l.b16 %v292
        %v426 = vunpack.c.l.b16 %v293
        %v427 = vunpack.c.l.b16 %v294
        %v428 = vunpack.c.l.b16 %v295
        %v429 = vunpack.c.l.b16 %v296
        %v430 = vunpack.c.l.b16 %v297
        %v431 = vunpack.c.l.b16 %v298
        %v432 = vunpack.c.l.b16 %v299
        %v433 = vunpack.c.l.b16 %v300
        %v434 = vunpack.c.l.b16 %v301
        %v435 = vunpack.c.l.b16 %v302
        %v436 = vunpack.c.l.b16 %v303
        %v437 = vunpack.c.l.b16 %v304
        %v438 = vunpack.c.l.b16 %v305
        %v439 = vunpack.c.l.b16 %v306
        %v440 = vunpack.c.l.b16 %v307
        %v441 = vunpack.c.l.b16 %v308
        %v442 = vunpack.c.l.b16 %v309
        %v443 = vunpack.c.l.b16 %v310
        %v444 = vunpack.c.l.b16 %v311
        %v445 = vunpack.c.l.b16 %v312
        %v446 = vunpack.c.l.b16 %v313
        %v447 = vunpack.c.l.b16 %v314
        %v448 = vunpack.c.l.b16 %v315
        %v449 = vunpack.c.l.b16 %v316
        %v450 = vunpack.c.l.b16 %v317
        %v451 = vunpack.c.l.b16 %v318
        %v452 = vunpack.c.l.b16 %v319
        %v453 = vunpack.c.l.b16 %v320
        %v454 = vunpack.c.l.b16 %v321
        %v455 = vunpack.c.l.b16 %v322
        %v456 = vunpack.c.l.b16 %v323
        %v457 = vunpack.c.l.b16 %v324
        %v458 = vunpack.c.l.b16 %v325
        %v459 = vunpack.c.l.b16 %v326
        %v460 = vunpack.c.l.b16 %v327
        %v461 = vunpack.c.l.b16 %v328
        %v462 = vunpack.c.l.b16 %v329
        %v463 = vunpack.c.l.b16 %v330
        %v464 = vunpack.c.l.b16 %v331
        %v465 = vunpack.c.l.b16 %v332
        %v466 = vunpack.c.l.b16 %v333
        %v467 = vunpack.c.l.b16 %v334
        %v468 = vunpack.c.l.b16 %v335
        %v469 = vunpack.c.l.b16 %v336
        %v470 = vunpack.c.l.b16 %v337
        %v471 = vunpack.c.l.b16 %v338
        %v472 = vunpack.c.l.b16 %v339
        %v473 = vunpack.c.l.b16 %v340
        %v474 = vunpack.c.l.b16 %v341
        %v475 = vunpack.c.l.b16 %v342
        %v476 = vunpack.c.l.b16 %v343
        %v477 = vunpack.c.l.b16 %v344
        %v478 = vunpack.c.l.b16 %v345
        %v479 = vpack.c.b16 %v416, %v415
        %v480 = vpack.c.b16 %v418, %v417
        %v481 = vpack.c.b16 %v420, %v419
        %v482 = vpack.c.b16 %v422, %v421
        %v483 = vpack.c.b16 %v424, %v423
        %v484 = vpack.c.b16 %v426, %v425
        %v485 = vpack.c.b16 %v428, %v427
        %v486 = vpack.c.b16 %v430, %v429
        %v487 = vpack.c.b16 %v432, %v431
        %v488 = vpack.c.b16 %v434, %v433
        %v489 = vpack.c.b16 %v436, %v435
        %v490 = vpack.c.b16 %v438, %v437
        %v491 = vpack.c.b16 %v440, %v439
        %v492 = vpack.c.b16 %v442, %v441
        %v493 = vpack.c.b16 %v444, %v443
        %v494 = vpack.c.b16 %v446, %v445
        %v495 = vpack.c.b16 %v448, %v447
        %v496 = vpack.c.b16 %v450, %v449
        %v497 = vpack.c.b16 %v452, %v451
        %v498 = vpack.c.b16 %v454, %v453
        %v499 = vpack.c.b16 %v456, %v455
        %v500 = vpack.c.b16 %v458, %v457
        %v501 = vpack.c.b16 %v460, %v459
        %v502 = vpack.c.b16 %v462, %v461
        %v503 = vpack.c.b16 %v464, %v463
        %v504 = vpack.c.b16 %v466, %v465
        %v505 = vpack.c.b16 %v468, %v467
        %v506 = vpack.c.b16 %v470, %v469
        %v507 = vpack.c.b16 %v472, %v471
        %v508 = vpack.c.b16 %v474, %v473
        %v509 = vpack.c.b16 %v476, %v475
        %v510 = vpack.c.b16 %v478, %v477
        %vm511 = vcmask 31744
        %v513 = vsel %vm511, %v479, 0
        %v516 = vsel %vm511, %v480, 0
        %v519 = vsel %vm511, %v481, 0
        %v522 = vsel %vm511, %v482, 0
        %v525 = vsel %vm511, %v483, 0
        %v528 = vsel %vm511, %v484, 0
        %v531 = vsel %vm511, %v485, 0
        %v534 = vsel %vm511, %v486, 0
        %v537 = vsel %vm511, %v487, 0
        %v540 = vsel %vm511, %v488, 0
        %v543 = vsel %vm511, %v489, 0
        %v546 = vsel %vm511, %v490, 0
        %v549 = vsel %vm511, %v491, 0
        %v552 = vsel %vm511, %v492, 0
        %v555 = vsel %vm511, %v493, 0
        %v558 = vsel %vm511, %v494, 0
        %v561 = vsel %vm511, %v495, 0
        %v564 = vsel %vm511, %v496, 0
        %v567 = vsel %vm511, %v497, 0
        %v570 = vsel %vm511, %v498, 0
        %v573 = vsel %vm511, %v499, 0
        %v576 = vsel %vm511, %v500, 0
        %v579 = vsel %vm511, %v501, 0
        %v582 = vsel %vm511, %v502, 0
        %v585 = vsel %vm511, %v503, 0
        %v588 = vsel %vm511, %v504, 0
        %v591 = vsel %vm511, %v505, 0
        %v594 = vsel %vm511, %v506, 0
        %v597 = vsel %vm511, %v507, 0
        %v600 = vsel %vm511, %v508, 0
        %v603 = vsel %vm511, %v509, 0
        %v606 = vsel %vm511, %v510, 0
        %vm608 = vcmask 1041408
        %v610 = vsel %vm608, %v346, 0
        %612 = vmatpush.bf16.msra.mxu0 0
        %613 = vmatpush.bf16.msra.mxu0 0
        %614 = vmatpush.bf16.msra.mxu0 0
        %615 = vmatpush.bf16.msra.mxu0 0
        %616 = vmatpush.bf16.msra.mxu0 0
        %617 = vmatpush.bf16.msra.mxu0 0
        %618 = vmatpush.bf16.msra.mxu0 0
        %619 = vmatpush.bf16.msra.mxu0 %v610
        %620 = vmatmul.bf16.gmra.mxu0 %v513
        %v621 = vpop.f32.mrf.mxu0
        %v622 = vadd.f32 %v349, %v621
        %v623 = vpop.f32.mrf.mxu0
        %v624 = vadd.f32 %v349, %v623
        %625 = vmatmul.bf16.gmra.mxu0 %v516
        %v626 = vpop.f32.mrf.mxu0
        %v627 = vadd.f32 %v349, %v626
        %v628 = vpop.f32.mrf.mxu0
        %v629 = vadd.f32 %v349, %v628
        %630 = vmatmul.bf16.gmra.mxu0 %v519
        %v631 = vpop.f32.mrf.mxu0
        %v632 = vadd.f32 %v349, %v631
        %v633 = vpop.f32.mrf.mxu0
        %v634 = vadd.f32 %v349, %v633
        %635 = vmatmul.bf16.gmra.mxu0 %v522
        %v636 = vpop.f32.mrf.mxu0
        %v637 = vadd.f32 %v349, %v636
        %v638 = vpop.f32.mrf.mxu0
        %v639 = vadd.f32 %v349, %v638
        %640 = vmatmul.bf16.gmra.mxu0 %v525
        %v641 = vpop.f32.mrf.mxu0
        %v642 = vadd.f32 %v349, %v641
        %v643 = vpop.f32.mrf.mxu0
        %v644 = vadd.f32 %v349, %v643
        %645 = vmatmul.bf16.gmra.mxu0 %v528
        %v646 = vpop.f32.mrf.mxu0
        %v647 = vadd.f32 %v349, %v646
        %v648 = vpop.f32.mrf.mxu0
        %v649 = vadd.f32 %v349, %v648
        %650 = vmatmul.bf16.gmra.mxu0 %v531
        %v651 = vpop.f32.mrf.mxu0
        %v652 = vadd.f32 %v349, %v651
        %v653 = vpop.f32.mrf.mxu0
        %v654 = vadd.f32 %v349, %v653
        %655 = vmatmul.bf16.gmra.mxu0 %v534
        %v656 = vpop.f32.mrf.mxu0
        %v657 = vadd.f32 %v349, %v656
        %v658 = vpop.f32.mrf.mxu0
        %v659 = vadd.f32 %v349, %v658
        %660 = vmatmul.bf16.gmra.mxu0 %v537
        %v661 = vpop.f32.mrf.mxu0
        %v662 = vadd.f32 %v349, %v661
        %v663 = vpop.f32.mrf.mxu0
        %v664 = vadd.f32 %v349, %v663
        %665 = vmatmul.bf16.gmra.mxu0 %v540
        %v666 = vpop.f32.mrf.mxu0
        %v667 = vadd.f32 %v349, %v666
        %v668 = vpop.f32.mrf.mxu0
        %v669 = vadd.f32 %v349, %v668
        %670 = vmatmul.bf16.gmra.mxu0 %v543
        %v671 = vpop.f32.mrf.mxu0
        %v672 = vadd.f32 %v349, %v671
        %v673 = vpop.f32.mrf.mxu0
        %v674 = vadd.f32 %v349, %v673
        %675 = vmatmul.bf16.gmra.mxu0 %v546
        %v676 = vpop.f32.mrf.mxu0
        %v677 = vadd.f32 %v349, %v676
        %v678 = vpop.f32.mrf.mxu0
        %v679 = vadd.f32 %v349, %v678
        %680 = vmatmul.bf16.gmra.mxu0 %v549
        %v681 = vpop.f32.mrf.mxu0
        %v682 = vadd.f32 %v349, %v681
        %v683 = vpop.f32.mrf.mxu0
        %v684 = vadd.f32 %v349, %v683
        %685 = vmatmul.bf16.gmra.mxu0 %v552
        %v686 = vpop.f32.mrf.mxu0
        %v687 = vadd.f32 %v349, %v686
        %v688 = vpop.f32.mrf.mxu0
        %v689 = vadd.f32 %v349, %v688
        %690 = vmatmul.bf16.gmra.mxu0 %v555
        %v691 = vpop.f32.mrf.mxu0
        %v692 = vadd.f32 %v349, %v691
        %v693 = vpop.f32.mrf.mxu0
        %v694 = vadd.f32 %v349, %v693
        %695 = vmatmul.bf16.gmra.mxu0 %v558
        %v696 = vpop.f32.mrf.mxu0
        %v697 = vadd.f32 %v349, %v696
        %v698 = vpop.f32.mrf.mxu0
        %v699 = vadd.f32 %v349, %v698
        %700 = vmatmul.bf16.gmra.mxu0 %v561
        %v701 = vpop.f32.mrf.mxu0
        %v702 = vadd.f32 %v349, %v701
        %v703 = vpop.f32.mrf.mxu0
        %v704 = vadd.f32 %v349, %v703
        %705 = vmatmul.bf16.gmra.mxu0 %v564
        %v706 = vpop.f32.mrf.mxu0
        %v707 = vadd.f32 %v349, %v706
        %v708 = vpop.f32.mrf.mxu0
        %v709 = vadd.f32 %v349, %v708
        %710 = vmatmul.bf16.gmra.mxu0 %v567
        %v711 = vpop.f32.mrf.mxu0
        %v712 = vadd.f32 %v349, %v711
        %v713 = vpop.f32.mrf.mxu0
        %v714 = vadd.f32 %v349, %v713
        %715 = vmatmul.bf16.gmra.mxu0 %v570
        %v716 = vpop.f32.mrf.mxu0
        %v717 = vadd.f32 %v349, %v716
        %v718 = vpop.f32.mrf.mxu0
        %v719 = vadd.f32 %v349, %v718
        %720 = vmatmul.bf16.gmra.mxu0 %v573
        %v721 = vpop.f32.mrf.mxu0
        %v722 = vadd.f32 %v349, %v721
        %v723 = vpop.f32.mrf.mxu0
        %v724 = vadd.f32 %v349, %v723
        %725 = vmatmul.bf16.gmra.mxu0 %v576
        %v726 = vpop.f32.mrf.mxu0
        %v727 = vadd.f32 %v349, %v726
        %v728 = vpop.f32.mrf.mxu0
        %v729 = vadd.f32 %v349, %v728
        %730 = vmatmul.bf16.gmra.mxu0 %v579
        %v731 = vpop.f32.mrf.mxu0
        %v732 = vadd.f32 %v349, %v731
        %v733 = vpop.f32.mrf.mxu0
        %v734 = vadd.f32 %v349, %v733
        %735 = vmatmul.bf16.gmra.mxu0 %v582
        %v736 = vpop.f32.mrf.mxu0
        %v737 = vadd.f32 %v349, %v736
        %v738 = vpop.f32.mrf.mxu0
        %v739 = vadd.f32 %v349, %v738
        %740 = vmatmul.bf16.gmra.mxu0 %v585
        %v741 = vpop.f32.mrf.mxu0
        %v742 = vadd.f32 %v349, %v741
        %v743 = vpop.f32.mrf.mxu0
        %v744 = vadd.f32 %v349, %v743
        %745 = vmatmul.bf16.gmra.mxu0 %v588
        %v746 = vpop.f32.mrf.mxu0
        %v747 = vadd.f32 %v349, %v746
        %v748 = vpop.f32.mrf.mxu0
        %v749 = vadd.f32 %v349, %v748
        %750 = vmatmul.bf16.gmra.mxu0 %v591
        %v751 = vpop.f32.mrf.mxu0
        %v752 = vadd.f32 %v349, %v751
        %v753 = vpop.f32.mrf.mxu0
        %v754 = vadd.f32 %v349, %v753
        %755 = vmatmul.bf16.gmra.mxu0 %v594
        %v756 = vpop.f32.mrf.mxu0
        %v757 = vadd.f32 %v349, %v756
        %v758 = vpop.f32.mrf.mxu0
        %v759 = vadd.f32 %v349, %v758
        %760 = vmatmul.bf16.gmra.mxu0 %v597
        %v761 = vpop.f32.mrf.mxu0
        %v762 = vadd.f32 %v349, %v761
        %v763 = vpop.f32.mrf.mxu0
        %v764 = vadd.f32 %v349, %v763
        %765 = vmatmul.bf16.gmra.mxu0 %v600
        %v766 = vpop.f32.mrf.mxu0
        %v767 = vadd.f32 %v349, %v766
        %v768 = vpop.f32.mrf.mxu0
        %v769 = vadd.f32 %v349, %v768
        %770 = vmatmul.bf16.gmra.mxu0 %v603
        %v771 = vpop.f32.mrf.mxu0
        %v772 = vadd.f32 %v349, %v771
        %v773 = vpop.f32.mrf.mxu0
        %v774 = vadd.f32 %v349, %v773
        %775 = vmatmul.bf16.gmra.mxu0 %v606
        %v776 = vpop.f32.mrf.mxu0
        %v777 = vadd.f32 %v349, %v776
        %v778 = vpop.f32.mrf.mxu0
        %v779 = vadd.f32 %v349, %v778
        %780 = vdwg.mxu0
        %v781 = vtanh.pop %v622
        %v782 = vtanh.pop %v624
        %v783 = vtanh.pop %v627
        %v784 = vtanh.pop %v629
        %v785 = vtanh.pop %v632
        %v786 = vtanh.pop %v634
        %v787 = vtanh.pop %v637
        %v788 = vtanh.pop %v639
        %v789 = vtanh.pop %v642
        %v790 = vtanh.pop %v644
        %v791 = vtanh.pop %v647
        %v792 = vtanh.pop %v649
        %v793 = vtanh.pop %v652
        %v794 = vtanh.pop %v654
        %v795 = vtanh.pop %v657
        %v796 = vtanh.pop %v659
        %v797 = vtanh.pop %v662
        %v798 = vtanh.pop %v664
        %v799 = vtanh.pop %v667
        %v800 = vtanh.pop %v669
        %v801 = vtanh.pop %v672
        %v802 = vtanh.pop %v674
        %v803 = vtanh.pop %v677
        %v804 = vtanh.pop %v679
        %v805 = vtanh.pop %v682
        %v806 = vtanh.pop %v684
        %v807 = vtanh.pop %v687
        %v808 = vtanh.pop %v689
        %v809 = vtanh.pop %v692
        %v810 = vtanh.pop %v694
        %v811 = vtanh.pop %v697
        %v812 = vtanh.pop %v699
        %v813 = vtanh.pop %v702
        %v814 = vtanh.pop %v704
        %v815 = vtanh.pop %v707
        %v816 = vtanh.pop %v709
        %v817 = vtanh.pop %v712
        %v818 = vtanh.pop %v714
        %v819 = vtanh.pop %v717
        %v820 = vtanh.pop %v719
        %v821 = vtanh.pop %v722
        %v822 = vtanh.pop %v724
        %v823 = vtanh.pop %v727
        %v824 = vtanh.pop %v729
        %v825 = vtanh.pop %v732
        %v826 = vtanh.pop %v734
        %v827 = vtanh.pop %v737
        %v828 = vtanh.pop %v739
        %v829 = vtanh.pop %v742
        %v830 = vtanh.pop %v744
        %v831 = vtanh.pop %v747
        %v832 = vtanh.pop %v749
        %v833 = vtanh.pop %v752
        %v834 = vtanh.pop %v754
        %v835 = vtanh.pop %v757
        %v836 = vtanh.pop %v759
        %v837 = vtanh.pop %v762
        %v838 = vtanh.pop %v764
        %v839 = vtanh.pop %v767
        %v840 = vtanh.pop %v769
        %v841 = vtanh.pop %v772
        %v842 = vtanh.pop %v774
        %v843 = vtanh.pop %v777
        %v844 = vtanh.pop %v779
        %v845 = vpack.c.bf16 %v782, %v781
        %v846 = vpack.c.bf16 %v784, %v783
        %v847 = vpack.c.bf16 %v786, %v785
        %v848 = vpack.c.bf16 %v788, %v787
        %v849 = vpack.c.bf16 %v790, %v789
        %v850 = vpack.c.bf16 %v792, %v791
        %v851 = vpack.c.bf16 %v794, %v793
        %v852 = vpack.c.bf16 %v796, %v795
        %v853 = vpack.c.bf16 %v798, %v797
        %v854 = vpack.c.bf16 %v800, %v799
        %v855 = vpack.c.bf16 %v802, %v801
        %v856 = vpack.c.bf16 %v804, %v803
        %v857 = vpack.c.bf16 %v806, %v805
        %v858 = vpack.c.bf16 %v808, %v807
        %v859 = vpack.c.bf16 %v810, %v809
        %v860 = vpack.c.bf16 %v812, %v811
        %v861 = vpack.c.bf16 %v814, %v813
        %v862 = vpack.c.bf16 %v816, %v815
        %v863 = vpack.c.bf16 %v818, %v817
        %v864 = vpack.c.bf16 %v820, %v819
        %v865 = vpack.c.bf16 %v822, %v821
        %v866 = vpack.c.bf16 %v824, %v823
        %v867 = vpack.c.bf16 %v826, %v825
        %v868 = vpack.c.bf16 %v828, %v827
        %v869 = vpack.c.bf16 %v830, %v829
        %v870 = vpack.c.bf16 %v832, %v831
        %v871 = vpack.c.bf16 %v834, %v833
        %v872 = vpack.c.bf16 %v836, %v835
        %v873 = vpack.c.bf16 %v838, %v837
        %v874 = vpack.c.bf16 %v840, %v839
        %v875 = vpack.c.bf16 %v842, %v841
        %v876 = vpack.c.bf16 %v844, %v843
        %v877 = vld [vmem:[%s3] sm:$0xf]
        %v878 = vld [vmem:[%s3 + $0x4] sm:$0xf]
        %v879 = vld [vmem:[%s3 + $0x8] sm:$0xf]
        %v880 = vld [vmem:[%s3 + $0xc] sm:$0xf]
        %v881 = vld [vmem:[%s3 + $0x10] sm:$0xf]
        %v882 = vld [vmem:[%s3 + $0x14] sm:$0xf]
        %v883 = vld [vmem:[%s3 + $0x18] sm:$0xf]
        %v884 = vld [vmem:[%s3 + $0x1c] sm:$0xf]
        %v885 = vld [vmem:[%s3 + $0x20] sm:$0xf]
        %v886 = vld [vmem:[%s3 + $0x24] sm:$0xf]
        %v887 = vld [vmem:[%s3 + $0x28] sm:$0xf]
        %v888 = vld [vmem:[%s3 + $0x2c] sm:$0xf]
        %v889 = vld [vmem:[%s3 + $0x30] sm:$0xf]
        %v890 = vld [vmem:[%s3 + $0x34] sm:$0xf]
        %v891 = vld [vmem:[%s3 + $0x38] sm:$0xf]
        %v892 = vld [vmem:[%s3 + $0x3c] sm:$0xf]
        %v893 = vld [vmem:[%s4] sm:$0x1]
        %v895 = vperm.slane %v893, 0
        %v913 = vunpack.c.l.b16 %v877
        %v914 = vunpack.c.l.b16 %v878
        %v915 = vunpack.c.l.b16 %v879
        %v916 = vunpack.c.l.b16 %v880
        %v917 = vunpack.c.l.b16 %v881
        %v918 = vunpack.c.l.b16 %v882
        %v919 = vunpack.c.l.b16 %v883
        %v920 = vunpack.c.l.b16 %v884
        %v921 = vunpack.c.l.b16 %v885
        %v922 = vunpack.c.l.b16 %v886
        %v923 = vunpack.c.l.b16 %v887
        %v924 = vunpack.c.l.b16 %v888
        %v925 = vunpack.c.l.b16 %v889
        %v926 = vunpack.c.l.b16 %v890
        %v927 = vunpack.c.l.b16 %v891
        %v928 = vunpack.c.l.b16 %v892
        %v929 = vpack.c.b16 %v914, %v913
        %v930 = vpack.c.b16 %v916, %v915
        %v931 = vpack.c.b16 %v918, %v917
        %v932 = vpack.c.b16 %v920, %v919
        %v933 = vpack.c.b16 %v922, %v921
        %v934 = vpack.c.b16 %v924, %v923
        %v935 = vpack.c.b16 %v926, %v925
        %v936 = vpack.c.b16 %v928, %v927
        %945 = vmatpush.bf16.msra.mxu0 %v936
        %946 = vmatpush.bf16.msra.mxu0 %v935
        %947 = vmatpush.bf16.msra.mxu0 %v934
        %948 = vmatpush.bf16.msra.mxu0 %v933
        %949 = vmatpush.bf16.msra.mxu0 %v932
        %950 = vmatpush.bf16.msra.mxu0 %v931
        %951 = vmatpush.bf16.msra.mxu0 %v930
        %952 = vmatpush.bf16.msra.mxu0 %v929
        %953 = vmatmul.bf16.gmra.mxu0 %v845
        %v954 = vpop.f32.mrf.mxu0
        %v955 = vadd.f32 %v895, %v954
        %v956 = vpop.f32.mrf.mxu0
        %v957 = vadd.f32 %v895, %v956
        %958 = vmatmul.bf16.gmra.mxu0 %v846
        %v959 = vpop.f32.mrf.mxu0
        %v960 = vadd.f32 %v895, %v959
        %v961 = vpop.f32.mrf.mxu0
        %v962 = vadd.f32 %v895, %v961
        %963 = vmatmul.bf16.gmra.mxu0 %v847
        %v964 = vpop.f32.mrf.mxu0
        %v965 = vadd.f32 %v895, %v964
        %v966 = vpop.f32.mrf.mxu0
        %v967 = vadd.f32 %v895, %v966
        %968 = vmatmul.bf16.gmra.mxu0 %v848
        %v969 = vpop.f32.mrf.mxu0
        %v970 = vadd.f32 %v895, %v969
        %v971 = vpop.f32.mrf.mxu0
        %v972 = vadd.f32 %v895, %v971
        %973 = vmatmul.bf16.gmra.mxu0 %v849
        %v974 = vpop.f32.mrf.mxu0
        %v975 = vadd.f32 %v895, %v974
        %v976 = vpop.f32.mrf.mxu0
        %v977 = vadd.f32 %v895, %v976
        %978 = vmatmul.bf16.gmra.mxu0 %v850
        %v979 = vpop.f32.mrf.mxu0
        %v980 = vadd.f32 %v895, %v979
        %v981 = vpop.f32.mrf.mxu0
        %v982 = vadd.f32 %v895, %v981
        %983 = vmatmul.bf16.gmra.mxu0 %v851
        %v984 = vpop.f32.mrf.mxu0
        %v985 = vadd.f32 %v895, %v984
        %v986 = vpop.f32.mrf.mxu0
        %v987 = vadd.f32 %v895, %v986
        %988 = vmatmul.bf16.gmra.mxu0 %v852
        %v989 = vpop.f32.mrf.mxu0
        %v990 = vadd.f32 %v895, %v989
        %v991 = vpop.f32.mrf.mxu0
        %v992 = vadd.f32 %v895, %v991
        %993 = vmatmul.bf16.gmra.mxu0 %v853
        %v994 = vpop.f32.mrf.mxu0
        %v995 = vadd.f32 %v895, %v994
        %v996 = vpop.f32.mrf.mxu0
        %v997 = vadd.f32 %v895, %v996
        %998 = vmatmul.bf16.gmra.mxu0 %v854
        %v999 = vpop.f32.mrf.mxu0
        %v1000 = vadd.f32 %v895, %v999
        %v1001 = vpop.f32.mrf.mxu0
        %v1002 = vadd.f32 %v895, %v1001
        %1003 = vmatmul.bf16.gmra.mxu0 %v855
        %v1004 = vpop.f32.mrf.mxu0
        %v1005 = vadd.f32 %v895, %v1004
        %v1006 = vpop.f32.mrf.mxu0
        %v1007 = vadd.f32 %v895, %v1006
        %1008 = vmatmul.bf16.gmra.mxu0 %v856
        %v1009 = vpop.f32.mrf.mxu0
        %v1010 = vadd.f32 %v895, %v1009
        %v1011 = vpop.f32.mrf.mxu0
        %v1012 = vadd.f32 %v895, %v1011
        %1013 = vmatmul.bf16.gmra.mxu0 %v857
        %v1014 = vpop.f32.mrf.mxu0
        %v1015 = vadd.f32 %v895, %v1014
        %v1016 = vpop.f32.mrf.mxu0
        %v1017 = vadd.f32 %v895, %v1016
        %1018 = vmatmul.bf16.gmra.mxu0 %v858
        %v1019 = vpop.f32.mrf.mxu0
        %v1020 = vadd.f32 %v895, %v1019
        %v1021 = vpop.f32.mrf.mxu0
        %v1022 = vadd.f32 %v895, %v1021
        %1023 = vmatmul.bf16.gmra.mxu0 %v859
        %v1024 = vpop.f32.mrf.mxu0
        %v1025 = vadd.f32 %v895, %v1024
        %v1026 = vpop.f32.mrf.mxu0
        %v1027 = vadd.f32 %v895, %v1026
        %1028 = vmatmul.bf16.gmra.mxu0 %v860
        %v1029 = vpop.f32.mrf.mxu0
        %v1030 = vadd.f32 %v895, %v1029
        %v1031 = vpop.f32.mrf.mxu0
        %v1032 = vadd.f32 %v895, %v1031
        %1033 = vmatmul.bf16.gmra.mxu0 %v861
        %v1034 = vpop.f32.mrf.mxu0
        %v1035 = vadd.f32 %v895, %v1034
        %v1036 = vpop.f32.mrf.mxu0
        %v1037 = vadd.f32 %v895, %v1036
        %1038 = vmatmul.bf16.gmra.mxu0 %v862
        %v1039 = vpop.f32.mrf.mxu0
        %v1040 = vadd.f32 %v895, %v1039
        %v1041 = vpop.f32.mrf.mxu0
        %v1042 = vadd.f32 %v895, %v1041
        %1043 = vmatmul.bf16.gmra.mxu0 %v863
        %v1044 = vpop.f32.mrf.mxu0
        %v1045 = vadd.f32 %v895, %v1044
        %v1046 = vpop.f32.mrf.mxu0
        %v1047 = vadd.f32 %v895, %v1046
        %1048 = vmatmul.bf16.gmra.mxu0 %v864
        %v1049 = vpop.f32.mrf.mxu0
        %v1050 = vadd.f32 %v895, %v1049
        %v1051 = vpop.f32.mrf.mxu0
        %v1052 = vadd.f32 %v895, %v1051
        %1053 = vmatmul.bf16.gmra.mxu0 %v865
        %v1054 = vpop.f32.mrf.mxu0
        %v1055 = vadd.f32 %v895, %v1054
        %v1056 = vpop.f32.mrf.mxu0
        %v1057 = vadd.f32 %v895, %v1056
        %1058 = vmatmul.bf16.gmra.mxu0 %v866
        %v1059 = vpop.f32.mrf.mxu0
        %v1060 = vadd.f32 %v895, %v1059
        %v1061 = vpop.f32.mrf.mxu0
        %v1062 = vadd.f32 %v895, %v1061
        %1063 = vmatmul.bf16.gmra.mxu0 %v867
        %v1064 = vpop.f32.mrf.mxu0
        %v1065 = vadd.f32 %v895, %v1064
        %v1066 = vpop.f32.mrf.mxu0
        %v1067 = vadd.f32 %v895, %v1066
        %1068 = vmatmul.bf16.gmra.mxu0 %v868
        %v1069 = vpop.f32.mrf.mxu0
        %v1070 = vadd.f32 %v895, %v1069
        %v1071 = vpop.f32.mrf.mxu0
        %v1072 = vadd.f32 %v895, %v1071
        %1073 = vmatmul.bf16.gmra.mxu0 %v869
        %v1074 = vpop.f32.mrf.mxu0
        %v1075 = vadd.f32 %v895, %v1074
        %v1076 = vpop.f32.mrf.mxu0
        %v1077 = vadd.f32 %v895, %v1076
        %1078 = vmatmul.bf16.gmra.mxu0 %v870
        %v1079 = vpop.f32.mrf.mxu0
        %v1080 = vadd.f32 %v895, %v1079
        %v1081 = vpop.f32.mrf.mxu0
        %v1082 = vadd.f32 %v895, %v1081
        %1083 = vmatmul.bf16.gmra.mxu0 %v871
        %v1084 = vpop.f32.mrf.mxu0
        %v1085 = vadd.f32 %v895, %v1084
        %v1086 = vpop.f32.mrf.mxu0
        %v1087 = vadd.f32 %v895, %v1086
        %1088 = vmatmul.bf16.gmra.mxu0 %v872
        %v1089 = vpop.f32.mrf.mxu0
        %v1090 = vadd.f32 %v895, %v1089
        %v1091 = vpop.f32.mrf.mxu0
        %v1092 = vadd.f32 %v895, %v1091
        %1093 = vmatmul.bf16.gmra.mxu0 %v873
        %v1094 = vpop.f32.mrf.mxu0
        %v1095 = vadd.f32 %v895, %v1094
        %v1096 = vpop.f32.mrf.mxu0
        %v1097 = vadd.f32 %v895, %v1096
        %1098 = vmatmul.bf16.gmra.mxu0 %v874
        %v1099 = vpop.f32.mrf.mxu0
        %v1100 = vadd.f32 %v895, %v1099
        %v1101 = vpop.f32.mrf.mxu0
        %v1102 = vadd.f32 %v895, %v1101
        %1103 = vmatmul.bf16.gmra.mxu0 %v875
        %v1104 = vpop.f32.mrf.mxu0
        %v1105 = vadd.f32 %v895, %v1104
        %v1106 = vpop.f32.mrf.mxu0
        %v1107 = vadd.f32 %v895, %v1106
        %1108 = vmatmul.bf16.gmra.mxu0 %v876
        %v1109 = vpop.f32.mrf.mxu0
        %v1110 = vadd.f32 %v895, %v1109
        %v1111 = vpop.f32.mrf.mxu0
        %v1112 = vadd.f32 %v895, %v1111
        %1113 = vdwg.mxu0
        %v1114 = vtanh.pop %v955
        %v1115 = vtanh.pop %v957
        %v1116 = vtanh.pop %v960
        %v1117 = vtanh.pop %v962
        %v1118 = vtanh.pop %v965
        %v1119 = vtanh.pop %v967
        %v1120 = vtanh.pop %v970
        %v1121 = vtanh.pop %v972
        %v1122 = vtanh.pop %v975
        %v1123 = vtanh.pop %v977
        %v1124 = vtanh.pop %v980
        %v1125 = vtanh.pop %v982
        %v1126 = vtanh.pop %v985
        %v1127 = vtanh.pop %v987
        %v1128 = vtanh.pop %v990
        %v1129 = vtanh.pop %v992
        %v1130 = vtanh.pop %v995
        %v1131 = vtanh.pop %v997
        %v1132 = vtanh.pop %v1000
        %v1133 = vtanh.pop %v1002
        %v1134 = vtanh.pop %v1005
        %v1135 = vtanh.pop %v1007
        %v1136 = vtanh.pop %v1010
        %v1137 = vtanh.pop %v1012
        %v1138 = vtanh.pop %v1015
        %v1139 = vtanh.pop %v1017
        %v1140 = vtanh.pop %v1020
        %v1141 = vtanh.pop %v1022
        %v1142 = vtanh.pop %v1025
        %v1143 = vtanh.pop %v1027
        %v1144 = vtanh.pop %v1030
        %v1145 = vtanh.pop %v1032
        %v1146 = vtanh.pop %v1035
        %v1147 = vtanh.pop %v1037
        %v1148 = vtanh.pop %v1040
        %v1149 = vtanh.pop %v1042
        %v1150 = vtanh.pop %v1045
        %v1151 = vtanh.pop %v1047
        %v1152 = vtanh.pop %v1050
        %v1153 = vtanh.pop %v1052
        %v1154 = vtanh.pop %v1055
        %v1155 = vtanh.pop %v1057
        %v1156 = vtanh.pop %v1060
        %v1157 = vtanh.pop %v1062
        %v1158 = vtanh.pop %v1065
        %v1159 = vtanh.pop %v1067
        %v1160 = vtanh.pop %v1070
        %v1161 = vtanh.pop %v1072
        %v1162 = vtanh.pop %v1075
        %v1163 = vtanh.pop %v1077
        %v1164 = vtanh.pop %v1080
        %v1165 = vtanh.pop %v1082
        %v1166 = vtanh.pop %v1085
        %v1167 = vtanh.pop %v1087
        %v1168 = vtanh.pop %v1090
        %v1169 = vtanh.pop %v1092
        %v1170 = vtanh.pop %v1095
        %v1171 = vtanh.pop %v1097
        %v1172 = vtanh.pop %v1100
        %v1173 = vtanh.pop %v1102
        %v1174 = vtanh.pop %v1105
        %v1175 = vtanh.pop %v1107
        %v1176 = vtanh.pop %v1110
        %v1177 = vtanh.pop %v1112
        %v1178 = vpack.c.bf16 %v1115, %v1114
        %v1179 = vpack.c.bf16 %v1117, %v1116
        %v1180 = vpack.c.bf16 %v1119, %v1118
        %v1181 = vpack.c.bf16 %v1121, %v1120
        %v1182 = vpack.c.bf16 %v1123, %v1122
        %v1183 = vpack.c.bf16 %v1125, %v1124
        %v1184 = vpack.c.bf16 %v1127, %v1126
        %v1185 = vpack.c.bf16 %v1129, %v1128
        %v1186 = vpack.c.bf16 %v1131, %v1130
        %v1187 = vpack.c.bf16 %v1133, %v1132
        %v1188 = vpack.c.bf16 %v1135, %v1134
        %v1189 = vpack.c.bf16 %v1137, %v1136
        %v1190 = vpack.c.bf16 %v1139, %v1138
        %v1191 = vpack.c.bf16 %v1141, %v1140
        %v1192 = vpack.c.bf16 %v1143, %v1142
        %v1193 = vpack.c.bf16 %v1145, %v1144
        %v1194 = vpack.c.bf16 %v1147, %v1146
        %v1195 = vpack.c.bf16 %v1149, %v1148
        %v1196 = vpack.c.bf16 %v1151, %v1150
        %v1197 = vpack.c.bf16 %v1153, %v1152
        %v1198 = vpack.c.bf16 %v1155, %v1154
        %v1199 = vpack.c.bf16 %v1157, %v1156
        %v1200 = vpack.c.bf16 %v1159, %v1158
        %v1201 = vpack.c.bf16 %v1161, %v1160
        %v1202 = vpack.c.bf16 %v1163, %v1162
        %v1203 = vpack.c.bf16 %v1165, %v1164
        %v1204 = vpack.c.bf16 %v1167, %v1166
        %v1205 = vpack.c.bf16 %v1169, %v1168
        %v1206 = vpack.c.bf16 %v1171, %v1170
        %v1207 = vpack.c.bf16 %v1173, %v1172
        %v1208 = vpack.c.bf16 %v1175, %v1174
        %v1209 = vpack.c.bf16 %v1177, %v1176
        %v1210 = vld [vmem:[%s5] sm:$0x1]
        %s1211 = sld [smem:[#allocation2]]
        %v1212 = vstv %s1211
        %1213 = vmatpush.bf16.xpose.msra.mxu0 %v1185
        %1214 = vmatpush.bf16.xpose.msra.mxu0 %v1184
        %1215 = vmatpush.bf16.xpose.msra.mxu0 %v1183
        %1216 = vmatpush.bf16.xpose.msra.mxu0 %v1182
        %1217 = vmatpush.bf16.xpose.msra.mxu0 %v1181
        %1218 = vmatpush.bf16.xpose.msra.mxu0 %v1180
        %1219 = vmatpush.bf16.xpose.msra.mxu0 %v1179
        %1220 = vmatpush.bf16.xpose.msra.mxu0 %v1178
        %1221 = vmatmul.bf16.gmra.mxu0 %v1210
        %v1222 = vpop.f32.mrf.mxu0
        %v1223 = vadd.f32 %v1212, %v1222
        %v1224 = vpop.f32.mrf.mxu0
        %1225 = vdwg.mxu0
        %1226 = vmatpush.bf16.xpose.msra.mxu0 %v1193
        %1227 = vmatpush.bf16.xpose.msra.mxu0 %v1192
        %1228 = vmatpush.bf16.xpose.msra.mxu0 %v1191
        %1229 = vmatpush.bf16.xpose.msra.mxu0 %v1190
        %1230 = vmatpush.bf16.xpose.msra.mxu0 %v1189
        %1231 = vmatpush.bf16.xpose.msra.mxu0 %v1188
        %1232 = vmatpush.bf16.xpose.msra.mxu0 %v1187
        %1233 = vmatpush.bf16.xpose.msra.mxu0 %v1186
        %1234 = vmatmul.bf16.gmra.mxu0 %v1210
        %v1235 = vpop.f32.mrf.mxu0
        %v1236 = vadd.f32 %v1212, %v1235
        %v1237 = vpop.f32.mrf.mxu0
        %1238 = vdwg.mxu0
        %1239 = vmatpush.bf16.xpose.msra.mxu0 %v1201
        %1240 = vmatpush.bf16.xpose.msra.mxu0 %v1200
        %1241 = vmatpush.bf16.xpose.msra.mxu0 %v1199
        %1242 = vmatpush.bf16.xpose.msra.mxu0 %v1198
        %1243 = vmatpush.bf16.xpose.msra.mxu0 %v1197
        %1244 = vmatpush.bf16.xpose.msra.mxu0 %v1196
        %1245 = vmatpush.bf16.xpose.msra.mxu0 %v1195
        %1246 = vmatpush.bf16.xpose.msra.mxu0 %v1194
        %1247 = vmatmul.bf16.gmra.mxu0 %v1210
        %v1248 = vpop.f32.mrf.mxu0
        %v1249 = vadd.f32 %v1212, %v1248
        %v1250 = vpop.f32.mrf.mxu0
        %1251 = vdwg.mxu0
        %1252 = vmatpush.bf16.xpose.msra.mxu0 %v1209
        %1253 = vmatpush.bf16.xpose.msra.mxu0 %v1208
        %1254 = vmatpush.bf16.xpose.msra.mxu0 %v1207
        %1255 = vmatpush.bf16.xpose.msra.mxu0 %v1206
        %1256 = vmatpush.bf16.xpose.msra.mxu0 %v1205
        %1257 = vmatpush.bf16.xpose.msra.mxu0 %v1204
        %1258 = vmatpush.bf16.xpose.msra.mxu0 %v1203
        %1259 = vmatpush.bf16.xpose.msra.mxu0 %v1202
        %1260 = vmatmul.bf16.gmra.mxu0 %v1210
        %v1261 = vpop.f32.mrf.mxu0
        %v1262 = vadd.f32 %v1212, %v1261
        %v1263 = vpop.f32.mrf.mxu0
        %1264 = vdwg.mxu0
        %v1269 = vrot.slane %v1236, 7
        %v1270 = vrot.slane %v1249, 6
        %v1271 = vrot.slane %v1262, 5
        %vm1272 = vcmask 1040384
        %v1273 = vsel %vm1272, %v1223, %v1269
        %vm1274 = vcmask 1042434
        %v1275 = vsel %vm1274, %v1270, %v1271
        %v1276 = vsel %vm608, %v1273, %v1275
        %v1278 = vlaneseq
        %vm1279 = vcmp.ge.s32.totalorder %v1278, 0
        %vm1280 = vcmp.lt.s32.totalorder %v1278, 512
        %vm1281 = vmand %vm1279, %vm1280
        %1282 = vst.msk [vmem:[%s273] sm:$0xf] %vm1281, %v1276
        %s1283 = sand.u32 %s182, 1
        %s1284 = scalar_lea.sflag [#allocation4], %s1283
        %s1285 = sand.u32 %s182, 1
        %s1286 = smul.addr %s1285, 4
        %s1287 = scalar_lea.vmem [#allocation3], %s1286
        // Predicated region
        $region49: #{tpu_custom_call.1} parent=47 // pred_check
          %p1288 = pneg %p192
        $region50: #{tpu_custom_call.1} parent=47 // pred_check_branch
          %1290 = sbr.rel (%p1288) target = $region52
        $region51: #{tpu_custom_call.1} parent=47 // pred_region
          %s1291 = smul.u32 4, %s22
          %1293 = vsyncadd %s1284, 0
          %s1294 = scalar_lea.hbm %s7, %s1291
          %s1296 = sshll.u32 %s1287, 4
          %s1297 = int_to_ptr.vmem [resolvable:$true] %s1296
          %s1298 = sshll.u32 %s1294, 4
          %s1299 = int_to_ptr.hbm [resolvable:$true] %s1298
          %1301 = dma.vmem_to_hbm [thread:$0]  %s1297, 64, %s1299, %s1284
        $region52: #{tpu_custom_call.1} parent=47 // pred_fallthru
          _
      $region48: #{tpu_custom_call.1} parent=5 // pred_fallthru
        _
      %p1302 = scmp.le.s32.totalorder 2, %s17
      // Predicated region
      $region53: #{tpu_custom_call.1} parent=5 // pred_check
        %p1303 = pneg %p1302
      $region54: #{tpu_custom_call.1} parent=5 // pred_check_branch
        %1305 = sbr.rel (%p1303) target = $region56
      $region55: #{tpu_custom_call.1} parent=5 // pred_region
        %s1306 = ssub.s32 %s17, 2
        // Predicated region
        $region57: #{tpu_custom_call.1} parent=55 // pred_check
          %p1307 = pneg %p198
        $region58: #{tpu_custom_call.1} parent=55 // pred_check_branch
          %1309 = sbr.rel (%p1307) target = $region60
        $region59: #{tpu_custom_call.1} parent=55 // pred_region
          %s1310 = sand.u32 %s183, 1
          %s1311 = scalar_lea.sflag [#allocation4], %s1310
          %s1312 = sand.u32 %s183, 1
          %s1313 = smul.addr %s1312, 4
          %s1314 = scalar_lea.vmem [#allocation3], %s1313
          %1316 = dma.done %s1311, 64
        $region60: #{tpu_custom_call.1} parent=55 // pred_fallthru
          _
      $region56: #{tpu_custom_call.1} parent=5 // pred_fallthru
        _
    $region6: #{tpu_custom_call.1} parent=1 // loop_footer
      %s21 = sadd.s32 1, %s17
    $region7: #{tpu_custom_call.1} parent=1 // loop_footer_branch
      %16 = sbr.rel target = $region3
    $region8: #{tpu_custom_call.1} parent=1 // loop_exit
      _
    %1317 = vsyncpa [#allocation4], 1
    %s1318 = scalar_lea.sflag [#allocation4], 1
    %1319 = vsyncpa %s1318, 1

</llo_original>
